<compile_context>
chip_gen: v5e
topology: v5e:2x2
jax: 0.10.0
libtpu: 0.0.40
codegen_flags: <defaults>
</compile_context>

<pallas_src>
import functools

import numpy as np
import jax
import jax.numpy as jnp
from jax.experimental import pallas as pl
from jax.experimental.pallas import tpu as pltpu


# ---------------------------------------------------------------------------
# Helpers
# ---------------------------------------------------------------------------
@functools.lru_cache(maxsize=None)
def _vmem_limit_bytes() -> int:
    """Generation-aware scoped-VMEM budget (~half of physical VMEM)."""
    try:
        cap = int(pltpu.get_tpu_info().vmem_capacity_bytes)
    except Exception:  # query unavailable -> conservative default
        return 32 * 1024 * 1024
    return int(min(max(cap // 2, 32 * 1024 * 1024), 64 * 1024 * 1024))


@functools.lru_cache(maxsize=None)
def _avg_matrix_np(L: int, kernel_size: int) -> np.ndarray:
    """(L, L) f32 matrix A so that moving_mean = A @ x (time on rows).

    The replicate padding of the PyTorch moving_avg is folded into the first
    and last columns (clamped indices)."""
    pad = (kernel_size - 1) // 2
    cnt = np.zeros((L, L), np.int32)
    for t in range(L):
        for k in range(-pad, pad + 1):
            j = min(max(t + k, 0), L - 1)
            cnt[t, j] += 1
    return cnt.astype(np.float32) / np.float32(kernel_size)


def _pick_lane_tile(n_total: int, rows: int) -> int:
    """Largest multiple-of-128 divisor of n_total whose (rows, tile) f32 block
    stays around <=2 MiB; prefers leaving >=2 grid steps (v7x dual TC).  Never
    falls back to a whole-array block when n_total is lane-divisible."""
    if n_total % 128 != 0:
        return n_total
    budget = max(128, ((2 * 1024 * 1024) // (4 * max(rows, 1))) // 128 * 128)
    cands = [t for t in range(128, n_total + 1, 128)
             if n_total % t == 0 and t <= budget]
    if not cands:
        return 128
    two_step = [t for t in cands if n_total // t >= 2]
    return max(two_step) if two_step else max(cands)


# ---------------------------------------------------------------------------
# Fused series_decomp kernel:
#   s = x (+ y, optional fused residual add)
#   mean = A @ s          (MXU band matrix, replicate padding folded into A)
#   res  = s - mean       (fused residual)
# ---------------------------------------------------------------------------
def _decomp_kernel(has_add, a_ref, x_ref, *rest):
    if has_add:
        y_ref, res_ref, mean_ref = rest
        s = x_ref[...].astype(jnp.float32) + y_ref[...].astype(jnp.float32)
    else:
        res_ref, mean_ref = rest
        s = x_ref[...].astype(jnp.float32)
    mean = jnp.dot(a_ref[...], s, preferred_element_type=jnp.float32)
    mean_ref[...] = mean.astype(mean_ref.dtype)
    res_ref[...] = (s - mean).astype(res_ref.dtype)


@functools.partial(jax.jit, static_argnames=("kernel_size",))
def series_decomp(x, y=None, *, kernel_size=25):
    """Autoformer series_decomp of (x + y) (y optional): (res, moving_mean)."""
    assert kernel_size % 2 == 1, "series_decomp needs an odd moving_avg kernel"
    B, L, C = x.shape
    a = jnp.asarray(_avg_matrix_np(L, kernel_size))
    has_add = y is not None
    kernel = functools.partial(_decomp_kernel, has_add)

    if C % 128 == 0:
        # Channels already lane-dense: natural (B, L, C) layout, grid over
        # (batch, channel-tile) so both v7x TensorCores get work.
        c_tile = _pick_lane_tile(C, L)
        data_spec = pl.BlockSpec((None, L, c_tile), lambda b, j: (b, 0, j))
        a_spec = pl.BlockSpec((L, L), lambda b, j: (0, 0))
        grid = (B, C // c_tile)
        sem = ("parallel", "parallel")
    else:
        # Small / odd channel count: keep the natural layout (no HBM
        # transposes), grid over batch, accept <128 lanes per store.
        data_spec = pl.BlockSpec((None, L, C), lambda b: (b, 0, 0))
        a_spec = pl.BlockSpec((L, L), lambda b: (0, 0))
        grid = (B,)
        sem = ("parallel",)

    in_specs = [a_spec, data_spec] + ([data_spec] if has_add else [])
    args = (a, x, y) if has_add else (a, x)
    res, mean = pl.pallas_call(
        kernel,
        out_shape=(jax.ShapeDtypeStruct((B, L, C), x.dtype),
                   jax.ShapeDtypeStruct((B, L, C), x.dtype)),
        grid=grid,
        in_specs=in_specs,
        out_specs=(data_spec, data_spec),
        compiler_params=pltpu.CompilerParams(
            dimension_semantics=sem,
            vmem_limit_bytes=_vmem_limit_bytes()),
    )(*args)
    return res, mean


# ---------------------------------------------------------------------------
# Position-wise FFN: conv1 (1x1) -> activation -> conv2 (1x1), no bias.
# d_ff is tiled through an f32 accumulator so the live intermediate is
# bounded to (tm, tff) instead of (tm, d_ff).
# ---------------------------------------------------------------------------
def _ffn_kernel(activation, x_ref, w1_ref, w2_ref, o_ref, acc_ref):
    k = pl.program_id(1)

    @pl.when(k == 0)
    def _():
        acc_ref[...] = jnp.zeros_like(acc_ref)

    h = jnp.dot(x_ref[...], w1_ref[...], preferred_element_type=jnp.float32)
    if activation == "relu":
        h = jnp.maximum(h, 0.0)
    else:
        h = jax.nn.gelu(h, approximate=False)  # matches F.gelu (erf form)
    acc_ref[...] += jnp.dot(h.astype(x_ref.dtype), w2_ref[...],
                            preferred_element_type=jnp.float32)

    @pl.when(k == pl.num_programs(1) - 1)
    def _():
        o_ref[...] = acc_ref[...].astype(o_ref.dtype)


def _row_tile(m: int) -> int:
    if m > 512:
        return 512                       # cdiv grid handles a ragged tail
    if m >= 16 and m % 16 == 0:
        return m // 2                    # >=2 parallel row steps (v7x dual TC)
    return m


def _ff_tile(d_ff: int) -> int:
    if d_ff % 128 != 0:
        return d_ff
    for t in (512, 384, 256, 128):
        if d_ff % t == 0:
            return t
    return 128


@functools.partial(jax.jit, static_argnames=("activation",))
def ffn_pallas(x, w1, w2, *, activation="relu"):
    B, L, D = x.shape
    d_ff = w1.shape[1]
    M = B * L
    xf = x.reshape(M, D)
    tm = _row_tile(M)
    tff = _ff_tile(d_ff)
    out = pl.pallas_call(
        functools.partial(_ffn_kernel, activation),
        out_shape=jax.ShapeDtypeStruct((M, D), x.dtype),
        grid=(pl.cdiv(M, tm), d_ff // tff),
        in_specs=[pl.BlockSpec((tm, D), lambda i, k: (i, 0)),
                  pl.BlockSpec((D, tff), lambda i, k: (0, k)),
                  pl.BlockSpec((tff, D), lambda i, k: (k, 0))],
        out_specs=pl.BlockSpec((tm, D), lambda i, k: (i, 0)),
        scratch_shapes=[pltpu.VMEM((tm, D), jnp.float32)],
        compiler_params=pltpu.CompilerParams(
            dimension_semantics=("parallel", "arbitrary"),
            vmem_limit_bytes=_vmem_limit_bytes()),
    )(xf, w1, w2)
    return out.reshape(B, L, D)


# ---------------------------------------------------------------------------
# Trend projection: (trend1 + trend2 + trend3) -> Conv1d(d_model -> c_out,
# k=3, circular padding, no bias).  The trend sum is fused, the three conv
# taps are merged into a single (L, 3D) x (3D, c_out_pad) MXU matmul, and the
# output is padded to a lane-dense multiple of 128.
# ---------------------------------------------------------------------------
def _proj_kernel(t1_ref, t2_ref, t3_ref, w_ref, o_ref):
    x = (t1_ref[...].astype(jnp.float32) + t2_ref[...].astype(jnp.float32)
         + t3_ref[...].astype(jnp.float32))
    # Static-shift circular rolls lower to static slices + concat (guaranteed
    # semantics); this kernel is read-bound on the three trend inputs.
    x_prev = jnp.roll(x, 1, axis=0)      # row t -> x[t-1]  (circular)
    x_next = jnp.roll(x, -1, axis=0)     # row t -> x[t+1]  (circular)
    xcat = jnp.concatenate([x_prev, x, x_next], axis=-1)        # (L, 3D)
    o_ref[...] = jnp.dot(xcat, w_ref[...],
                         preferred_element_type=jnp.float32).astype(o_ref.dtype)


@jax.jit
def trend_projection_pallas(t1, t2, t3, w):
    """w: (3, d_model, c_out); w[k] is the tap applied to x[t + k - 1]."""
    B, L, D = t1.shape
    c_out = w.shape[-1]
    w_flat = w.reshape(3 * D, c_out)
    c_pad = -(-c_out // 128) * 128       # lane-dense output width
    if c_pad != c_out:
        w_flat = jnp.pad(w_flat, ((0, 0), (0, c_pad - c_out)))
    t_spec = pl.BlockSpec((None, L, D), lambda b: (b, 0, 0))
    out = pl.pallas_call(
        _proj_kernel,
        out_shape=jax.ShapeDtypeStruct((B, L, c_pad), t1.dtype),
        grid=(B,),                       # >=2 parallel steps for typical B>=2
        in_specs=[t_spec, t_spec, t_spec,
                  pl.BlockSpec((3 * D, c_pad), lambda b: (0, 0))],
        out_specs=pl.BlockSpec((None, L, c_pad), lambda b: (b, 0, 0)),
        compiler_params=pltpu.CompilerParams(
            dimension_semantics=("parallel",),
            vmem_limit_bytes=_vmem_limit_bytes()),
    )(t1, t2, t3, w_flat)
    return out[..., :c_out] if c_pad != c_out else out


# ---------------------------------------------------------------------------
# DecoderLayer forward (dropout = identity, inference mode)
# ---------------------------------------------------------------------------
def _simple_attention(q, k, v):
    # TODO(synk): placeholder for the externally injected AutoCorrelation
    #             attention modules (plain-JAX scaled-dot-product).
    d = q.shape[-1]
    s = jnp.einsum("bqd,bkd->bqk", q, k) / jnp.sqrt(float(d))
    return jnp.einsum("bqk,bkd->bqd", jax.nn.softmax(s, axis=-1), v)


def decoder_layer_forward(x, cross, params, *, moving_avg_kernel=25,
                          activation="relu",
                          self_attention=_simple_attention,
                          cross_attention=_simple_attention):
    # Residual adds are fused into the decomp kernels (second input).
    x, trend1 = series_decomp(x, self_attention(x, x, x),
                              kernel_size=moving_avg_kernel)
    x, trend2 = series_decomp(x, cross_attention(x, cross, cross),
                              kernel_size=moving_avg_kernel)
    y = ffn_pallas(x, params["w1"], params["w2"], activation=activation)
    x, trend3 = series_decomp(x, y, kernel_size=moving_avg_kernel)
    residual_trend = trend_projection_pallas(trend1, trend2, trend3,
                                             params["w_proj"])
    return x, residual_trend


# ---------------------------------------------------------------------------
# Pure-JAX references (mirror the PyTorch forward exactly)
# ---------------------------------------------------------------------------
def _ref_series_decomp(x, K):
    pad = (K - 1) // 2
    front = jnp.repeat(x[:, :1, :], pad, axis=1)
    end = jnp.repeat(x[:, -1:, :], pad, axis=1)
    xp = jnp.concatenate([front, x, end], axis=1)
    L = x.shape[1]
    mean = jnp.stack([xp[:, t:t + K, :].mean(axis=1) for t in range(L)], axis=1)
    return x - mean, mean


def _ref_decoder_layer(x, cross, params, K, activation="relu"):
    hi = jax.lax.Precision.HIGHEST
    x = x + _simple_attention(x, x, x)
    x, t1 = _ref_series_decomp(x, K)
    x = x + _simple_attention(x, cross, cross)
    x, t2 = _ref_series_decomp(x, K)
    h = jnp.dot(x, params["w1"], precision=hi)
    h = jnp.maximum(h, 0.0) if activation == "relu" else jax.nn.gelu(h, approximate=False)
    y = jnp.dot(h, params["w2"], precision=hi)
    x, t3 = _ref_series_decomp(x + y, K)
    rt = t1 + t2 + t3
    rt_prev = jnp.roll(rt, 1, axis=1)
    rt_next = jnp.roll(rt, -1, axis=1)
    proj = (jnp.dot(rt_prev, params["w_proj"][0], precision=hi)
            + jnp.dot(rt, params["w_proj"][1], precision=hi)
            + jnp.dot(rt_next, params["w_proj"][2], precision=hi))
    return x, proj


if __name__ == "__main__":
    key = jax.random.PRNGKey(0)
    B, L, d_model, c_out = 2, 16, 32, 8
    d_ff = 4 * d_model
    K = 25  # Autoformer default moving_avg kernel size (odd, stride 1)

    k1, k2, k3, k4, k5, k6 = jax.random.split(key, 6)
    x = jax.random.normal(k1, (B, L, d_model), jnp.float32)
    cross = jax.random.normal(k2, (B, L, d_model), jnp.float32)
    y_add = jax.random.normal(k6, (B, L, d_model), jnp.float32)
    params = {
        "w1": 0.1 * jax.random.normal(k3, (d_model, d_ff), jnp.float32),
        "w2": 0.1 * jax.random.normal(k4, (d_ff, d_model), jnp.float32),
        "w_proj": 0.1 * jax.random.normal(k5, (3, d_model, c_out), jnp.float32),
    }

    # 1) series_decomp (MXU band-matrix moving average) vs reference.
    #    1e-2 tolerance hedges against per-generation MXU f32 pass behaviour;
    #    the fused-residual identity (exact VPU math) is checked at 1e-5.
    res_k, mean_k = jax.block_until_ready(series_decomp(x, kernel_size=K))
    res_r, mean_r = _ref_series_decomp(x, K)
    assert mean_k.shape == mean_r.shape and res_k.shape == res_r.shape
    assert jnp.allclose(mean_k, mean_r, atol=1e-2, rtol=1e-2)
    assert jnp.allclose(res_k, res_r, atol=1e-2, rtol=1e-2)
    assert jnp.allclose(res_k + mean_k, x, atol=1e-5, rtol=1e-5)

    # 2) fused-add variant: decomp of (x + y) in a single kernel.
    res_k2, mean_k2 = jax.block_until_ready(series_decomp(x, y_add, kernel_size=K))
    res_r2, mean_r2 = _ref_series_decomp(x + y_add, K)
    assert jnp.allclose(mean_k2, mean_r2, atol=1e-2, rtol=1e-2)
    assert jnp.allclose(res_k2 + mean_k2, x + y_add, atol=1e-5, rtol=1e-5)

    # 3) full decoder-layer forward (looser tol: MXU default-precision matmuls
    #    in decomp / FFN / projection vs a Precision.HIGHEST reference).
    out_x, out_trend = jax.block_until_ready(
        decoder_layer_forward(x, cross, params, moving_avg_kernel=K))
    ref_x, ref_trend = _ref_decoder_layer(x, cross, params, K)
    assert out_x.shape == (B, L, d_model) and out_trend.shape == (B, L, c_out)
    assert jnp.allclose(out_x, ref_x, atol=3e-2, rtol=3e-2)
    assert jnp.allclose(out_trend, ref_trend, atol=3e-2, rtol=3e-2)

    print("KERNEL_OK")
</pallas_src>

<mosaic_0001>
module attributes {stable_mosaic.version = 11 : i64} {
  func.func @_decomp_kernel(%arg0: i32, %arg1: memref<16x16xf32, #tpu.memory_space<vmem>>, %arg2: memref<1x16x32xf32, #tpu.memory_space<vmem>>, %arg3: memref<1x16x32xf32, #tpu.memory_space<vmem>>, %arg4: memref<1x16x32xf32, #tpu.memory_space<vmem>>) attributes {dimension_semantics = [#tpu.dimension_semantics<parallel>], iteration_bounds = array<i64: 2>, scalar_prefetch = 0 : i64, scratch_operands = 0 : i64, tpu.core_type = #tpu.core_type<tc>, window_params = [{pipeline_mode = #tpu.pipeline_mode<synchronous>, transform_indices = @transform_0, window_bounds = array<i64: 16, 16>}, {transform_indices = @transform_1, window_bounds = array<i64: 1, 16, 32>}, {transform_indices = @transform_2, window_bounds = array<i64: 1, 16, 32>}, {transform_indices = @transform_3, window_bounds = array<i64: 1, 16, 32>}]} {
    %c0 = arith.constant 0 : index
    %c0_0 = arith.constant 0 : index
    %c0_1 = arith.constant 0 : index
    %0 = vector.load %arg2[%c0, %c0_0, %c0_1] : memref<1x16x32xf32, #tpu.memory_space<vmem>>, vector<1x16x32xf32>
    %1 = vector.shape_cast %0 : vector<1x16x32xf32> to vector<16x32xf32>
    %c0_2 = arith.constant 0 : index
    %c0_3 = arith.constant 0 : index
    %2 = vector.load %arg1[%c0_2, %c0_3] : memref<16x16xf32, #tpu.memory_space<vmem>>, vector<16x16xf32>
    %cst = arith.constant dense<0.000000e+00> : vector<16x32xf32>
    %3 = tpu.matmul %2, %1, %cst {dimension_numbers = #tpu.dot_dimension_numbers<[1], [0], [0], [1], [0, 0, 1, 1], [], []>} : vector<16x16xf32>, vector<16x32xf32>, vector<16x32xf32> -> vector<16x32xf32>
    %c0_4 = arith.constant 0 : index
    %c0_5 = arith.constant 0 : index
    %c0_6 = arith.constant 0 : index
    %4 = vector.load %arg4[%c0_4, %c0_5, %c0_6] : memref<1x16x32xf32, #tpu.memory_space<vmem>>, vector<1x16x32xf32>
    %5 = vector.shape_cast %4 : vector<1x16x32xf32> to vector<16x32xf32>
    %6 = vector.shape_cast %3 : vector<16x32xf32> to vector<1x16x32xf32>
    tpu.vector_store %arg4[%c0_4, %c0_5, %c0_6], %6 {strides = array<i32>} : memref<1x16x32xf32, #tpu.memory_space<vmem>>, vector<1x16x32xf32>,
    %7 = arith.subf %1, %3 : vector<16x32xf32>
    %c0_7 = arith.constant 0 : index
    %c0_8 = arith.constant 0 : index
    %c0_9 = arith.constant 0 : index
    %8 = vector.load %arg3[%c0_7, %c0_8, %c0_9] : memref<1x16x32xf32, #tpu.memory_space<vmem>>, vector<1x16x32xf32>
    %9 = vector.shape_cast %8 : vector<1x16x32xf32> to vector<16x32xf32>
    %10 = vector.shape_cast %7 : vector<16x32xf32> to vector<1x16x32xf32>
    tpu.vector_store %arg3[%c0_7, %c0_8, %c0_9], %10 {strides = array<i32>} : memref<1x16x32xf32, #tpu.memory_space<vmem>>, vector<1x16x32xf32>,
    return
  }
  func.func @transform_0(%arg0: i32) -> (i32, i32) {
    %c0_i32 = arith.constant 0 : i32
    %c0_i32_0 = arith.constant 0 : i32
    %c0_i32_1 = arith.constant 0 : i32
    return %c0_i32, %c0_i32_0 : i32, i32
  }
  func.func @transform_1(%arg0: i32) -> (i32, i32, i32) {
    %c0_i32 = arith.constant 0 : i32
    %c0_i32_0 = arith.constant 0 : i32
    %c0_i32_1 = arith.constant 0 : i32
    return %arg0, %c0_i32, %c0_i32_0 : i32, i32, i32
  }
  func.func @transform_2(%arg0: i32) -> (i32, i32, i32) {
    %c0_i32 = arith.constant 0 : i32
    %c0_i32_0 = arith.constant 0 : i32
    %c0_i32_1 = arith.constant 0 : i32
    return %arg0, %c0_i32, %c0_i32_0 : i32, i32, i32
  }
  func.func @transform_3(%arg0: i32) -> (i32, i32, i32) {
    %c0_i32 = arith.constant 0 : i32
    %c0_i32_0 = arith.constant 0 : i32
    %c0_i32_1 = arith.constant 0 : i32
    return %arg0, %c0_i32, %c0_i32_0 : i32, i32, i32
  }
}

</mosaic_0001>

<llo_original>
// kernel: series_decomp.1
$region0: #{series_decomp.1}
  #allocation0 [shape = 'u32[]', space=smem, size = 0x4, offset = 0x4, fixed_abs, tag = 'smem constant byte address 0x4 - core index']
  #allocation1 [shape = 'u32[72,128]{1,0:T(1,128)}', space=vmem, size = 0x9000, scoped, tag = 'internal scratch']
  %s0 = inlined_call_operand.hbm [shape: f32[16,16], index: 0, kind: input, shape index: {}]
  %s1 = inlined_call_operand.hbm [shape: f32[2,16,32], index: 1, kind: input, shape index: {}]
  %s2 = inlined_call_operand.hbm [shape: f32[2,16,32], index: 2, kind: output, shape index: {0}]
  %s3 = inlined_call_operand.hbm [shape: f32[2,16,32], index: 3, kind: output, shape index: {1}]
  %4 = xla_tuple %s2, %s3
  %s5 = sld [smem:[#allocation0]]
  $region57: #{series_decomp.1} parent=0
    _
  %s7 = ssub.s32 1, %s5
  %s8 = scalar_select 0, %s7, %s5
  $region1: #{series_decomp.1} parent=0
    #allocation2 [shape = 'u8[8192]{0}', space=vmem, size = 0x2000, scoped, tag = 'input window, operand 0, single buffered']
    #allocation3 [shape = 's32[2]{0}', space=sflag, size = 0x8, scoped, tag = 'scoped memory for series_decomp.1']
    #allocation4 [shape = 's32[2]{0}', space=sflag, size = 0x8, scoped, tag = 'scoped memory for series_decomp.1']
    #allocation5 [shape = 'u8[16384]{0}', space=vmem, size = 0x4000, scoped, tag = 'input window, operand 1']
    #allocation6 [shape = 's32[2]{0}', space=sflag, size = 0x8, scoped, tag = 'scoped memory for series_decomp.1']
    #allocation7 [shape = 'u8[16384]{0}', space=vmem, size = 0x4000, scoped, tag = 'output window, operand 0']
    #allocation8 [shape = 'u8[16384]{0}', space=vmem, size = 0x4000, scoped, tag = 'output window, operand 1']
    #allocation9 [shape = 's32[2]{0}', space=sflag, size = 0x8, scoped, tag = 'scoped memory for series_decomp.1']
    %9 = vsyncpa [#allocation3], 0
    %10 = vsyncpa [#allocation6], 0
    %s11 = scalar_lea.sflag [#allocation6], 1
    %12 = vsyncpa %s11, 0
    %13 = vsyncpa [#allocation4], 0
    %s14 = scalar_lea.sflag [#allocation4], 1
    %15 = vsyncpa %s14, 0
    %16 = vsyncpa [#allocation9], 0
    %s17 = scalar_lea.sflag [#allocation9], 1
    %18 = vsyncpa %s17, 0
    loop: start=0, step=1, limit=4
    $region2: #{series_decomp.1} parent=1 // loop_pre_header
      _
    $region3: #{series_decomp.1} parent=1 // loop_header
      %s20 = sphi 0, %s24
      %p21 = scmp.ge.s32.totalorder %s20, 4
      %s28 = sphi 0, %s28
      %s30 = sphi 0, %s28
      %s31 = sphi 0, %s30
      %s45 = sphi 0, %s31
      %s51 = sphi 0, %s53
      %s54 = sphi 0, %s51
      %s55 = sphi 0, %s54
      %s71 = sphi 0, %s55
      %s77 = sphi 0, %s79
      %s80 = sphi 0, %s77
      %s81 = sphi 0, %s80
      %s97 = sphi 0, %s81
      %s103 = sphi 0, %s105
      %s106 = sphi 0, %s103
      %s107 = sphi 0, %s106
      %s123 = sphi 0, %s107
    $region4: #{series_decomp.1} parent=1 // loop_header_branch
      %23 = sbr.rel (%p21) target = $region8
    $region5: #{series_decomp.1} parent=1 // loop_body
      %s25 = ssub.s32 %s20, 1
      %s26 = ssub.s32 %s20, 2
      %s27 = sadd.s32 %s20, 1
      %s29 = sadd.s32 %s28, 1
      %p32 = scmp.eq.s32.totalorder %s20, 1
      %p33 = scmp.ne.s32.totalorder %s28, %s30
      %p34 = scmp.eq.s32.totalorder %s20, 0
      %p35 = por %p33, %p34
      %p36 = scmp.ne.s32.totalorder %s28, %s30
      %p37 = scmp.eq.s32.totalorder %s25, 1
      %p38 = por %p36, %p37
      %p39 = scmp.ne.s32.totalorder %s30, %s31
      %p40 = scmp.eq.s32.totalorder %s25, 0
      %p41 = por %p39, %p40
      %p42 = scmp.ne.s32.totalorder %s30, %s31
      %p43 = scmp.eq.s32.totalorder %s26, 1
      %p44 = por %p42, %p43
      %p46 = scmp.ne.s32.totalorder %s31, %s45
      %p47 = scmp.eq.s32.totalorder %s26, 0
      %p48 = por %p46, %p47
      %s49 = ssub.s32 %s20, %s27
      %p50 = scmp.eq.s32.totalorder %s49, 0
      %s52 = sadd.s32 %s51, 1
      %s53 = scalar_select %p50, %s51, %s52
      %p56 = pneg %p50
      %p57 = scmp.eq.s32.totalorder %s20, 1
      %p58 = por %p56, %p57
      %p59 = scmp.ne.s32.totalorder %s51, %s54
      %p60 = scmp.eq.s32.totalorder %s20, 0
      %p61 = por %p59, %p60
      %p62 = scmp.ne.s32.totalorder %s51, %s54
      %p63 = scmp.eq.s32.totalorder %s25, 1
      %p64 = por %p62, %p63
      %p65 = scmp.ne.s32.totalorder %s54, %s55
      %p66 = scmp.eq.s32.totalorder %s25, 0
      %p67 = por %p65, %p66
      %p68 = scmp.ne.s32.totalorder %s54, %s55
      %p69 = scmp.eq.s32.totalorder %s26, 1
      %p70 = por %p68, %p69
      %p72 = scmp.ne.s32.totalorder %s55, %s71
      %p73 = scmp.eq.s32.totalorder %s26, 0
      %p74 = por %p72, %p73
      %s75 = ssub.s32 %s20, %s27
      %p76 = scmp.eq.s32.totalorder %s75, 0
      %s78 = sadd.s32 %s77, 1
      %s79 = scalar_select %p76, %s77, %s78
      %p82 = pneg %p76
      %p83 = scmp.eq.s32.totalorder %s20, 1
      %p84 = por %p82, %p83
      %p85 = scmp.ne.s32.totalorder %s77, %s80
      %p86 = scmp.eq.s32.totalorder %s20, 0
      %p87 = por %p85, %p86
      %p88 = scmp.ne.s32.totalorder %s77, %s80
      %p89 = scmp.eq.s32.totalorder %s25, 1
      %p90 = por %p88, %p89
      %p91 = scmp.ne.s32.totalorder %s80, %s81
      %p92 = scmp.eq.s32.totalorder %s25, 0
      %p93 = por %p91, %p92
      %p94 = scmp.ne.s32.totalorder %s80, %s81
      %p95 = scmp.eq.s32.totalorder %s26, 1
      %p96 = por %p94, %p95
      %p98 = scmp.ne.s32.totalorder %s81, %s97
      %p99 = scmp.eq.s32.totalorder %s26, 0
      %p100 = por %p98, %p99
      %s101 = ssub.s32 %s20, %s27
      %p102 = scmp.eq.s32.totalorder %s101, 0
      %s104 = sadd.s32 %s103, 1
      %s105 = scalar_select %p102, %s103, %s104
      %p108 = pneg %p102
      %p109 = scmp.eq.s32.totalorder %s20, 1
      %p110 = por %p108, %p109
      %p111 = scmp.ne.s32.totalorder %s103, %s106
      %p112 = scmp.eq.s32.totalorder %s20, 0
      %p113 = por %p111, %p112
      %p114 = scmp.ne.s32.totalorder %s103, %s106
      %p115 = scmp.eq.s32.totalorder %s25, 1
      %p116 = por %p114, %p115
      %p117 = scmp.ne.s32.totalorder %s106, %s107
      %p118 = scmp.eq.s32.totalorder %s25, 0
      %p119 = por %p117, %p118
      %p120 = scmp.ne.s32.totalorder %s106, %s107
      %p121 = scmp.eq.s32.totalorder %s26, 1
      %p122 = por %p120, %p121
      %p124 = scmp.ne.s32.totalorder %s107, %s123
      %p125 = scmp.eq.s32.totalorder %s26, 0
      %p126 = por %p124, %p125
      %p127 = scmp.le.s32.totalorder 1, %s20
      %p128 = scmp.lt.s32.totalorder %s20, 3
      %p129 = pnand %p127, %p128
      %p130 = pneg %p129
      // Predicated region
      $region9: #{series_decomp.1} parent=5 // pred_check
        _
      $region10: #{series_decomp.1} parent=5 // pred_check_branch
        %132 = sbr.rel (%p129) target = $region12
      $region11: #{series_decomp.1} parent=5 // pred_region
        %s133 = ssub.s32 %s20, 1
        // Predicated region
        $region13: #{series_decomp.1} parent=11 // pred_check
          %p134 = pneg %p41
        $region14: #{series_decomp.1} parent=11 // pred_check_branch
          %136 = sbr.rel (%p134) target = $region16
        $region15: #{series_decomp.1} parent=11 // pred_region
          %138 = vsyncadd [#allocation3], 0
          %s139 = sshll.u32 %s0, 4
          %s140 = int_to_ptr.hbm [resolvable:$true] %s139
          %s141 = sshll.u32 [#allocation2], 4
          %s142 = int_to_ptr.vmem [resolvable:$true] %s141
          %147 = dma.hbm_to_vmem [thread:$0]  %s140, 256, %s142, [#allocation3], 128, 128, 8
        $region16: #{series_decomp.1} parent=11 // pred_fallthru
          _
      $region12: #{series_decomp.1} parent=5 // pred_fallthru
        _
      %p148 = scmp.lt.s32.totalorder %s20, 2
      // Predicated region
      $region17: #{series_decomp.1} parent=5 // pred_check
        %p149 = pneg %p148
      $region18: #{series_decomp.1} parent=5 // pred_check_branch
        %151 = sbr.rel (%p149) target = $region20
      $region19: #{series_decomp.1} parent=5 // pred_region
        // Predicated region
        $region21: #{series_decomp.1} parent=19 // pred_check
          %p152 = pneg %p61
        $region22: #{series_decomp.1} parent=19 // pred_check_branch
          %154 = sbr.rel (%p152) target = $region24
        $region23: #{series_decomp.1} parent=19 // pred_region
          %s155 = sand.u32 %s51, 1
          %s156 = scalar_lea.sflag [#allocation6], %s155
          %s157 = sand.u32 %s51, 1
          %s158 = smul.addr %s157, 16
          %s159 = scalar_lea.vmem [#allocation5], %s158
          %161 = vsyncadd %s156, 0
          %s162 = smul.addr %s20, 2
          %s163 = smul.addr %s162, 8
          %s164 = scalar_lea.hbm %s1, %s163
          %s165 = sshll.u32 %s164, 4
          %s166 = int_to_ptr.hbm [resolvable:$true] %s165
          %s167 = sshll.u32 %s159, 4
          %s168 = int_to_ptr.vmem [resolvable:$true] %s167
          %173 = dma.hbm_to_vmem [thread:$0]  %s166, 256, %s168, %s156, 128, 128, 8
        $region24: #{series_decomp.1} parent=19 // pred_fallthru
          _
      $region20: #{series_decomp.1} parent=5 // pred_fallthru
        _
      %p174 = scmp.le.s32.totalorder 1, %s20
      %p175 = scmp.lt.s32.totalorder %s20, 3
      %p176 = pnand %p174, %p175
      %p177 = pneg %p176
      // Predicated region
      $region25: #{series_decomp.1} parent=5 // pred_check
        _
      $region26: #{series_decomp.1} parent=5 // pred_check_branch
        %179 = sbr.rel (%p176) target = $region28
      $region27: #{series_decomp.1} parent=5 // pred_region
        %s180 = ssub.s32 %s20, 1
        // Predicated region
        $region29: #{series_decomp.1} parent=27 // pred_check
          %p181 = pneg %p41
        $region30: #{series_decomp.1} parent=27 // pred_check_branch
          %183 = sbr.rel (%p181) target = $region32
        $region31: #{series_decomp.1} parent=27 // pred_region
          %185 = dma.done [#allocation3], 256
        $region32: #{series_decomp.1} parent=27 // pred_fallthru
          _
        %s186 = sand.u32 %s54, 1
        %s187 = scalar_lea.sflag [#allocation6], %s186
        %s188 = sand.u32 %s54, 1
        %s189 = smul.addr %s188, 16
        %s190 = scalar_lea.vmem [#allocation5], %s189
        // Predicated region
        $region33: #{series_decomp.1} parent=27 // pred_check
          %p191 = pneg %p67
        $region34: #{series_decomp.1} parent=27 // pred_check_branch
          %193 = sbr.rel (%p191) target = $region36
        $region35: #{series_decomp.1} parent=27 // pred_region
          %195 = dma.done %s187, 256
        $region36: #{series_decomp.1} parent=27 // pred_fallthru
          _
        %p196 = pneg %p41
        %p197 = pneg %p38
        %s198 = sand.u32 %s54, 1
        %s199 = scalar_lea.sflag [#allocation6], %s198
        %s200 = sand.u32 %s54, 1
        %s201 = smul.addr %s200, 16
        %s202 = scalar_lea.vmem [#allocation5], %s201
        %p203 = pneg %p67
        %p204 = pneg %p64
        %p205 = pneg %p93
        %p206 = pneg %p90
        %s207 = sand.u32 %s80, 1
        %s208 = scalar_lea.sflag [#allocation4], %s207
        %s209 = sand.u32 %s80, 1
        %s210 = smul.addr %s209, 16
        %s211 = scalar_lea.vmem [#allocation7], %s210
        %p212 = pneg %p119
        %p213 = pneg %p116
        %s214 = sand.u32 %s106, 1
        %s215 = scalar_lea.sflag [#allocation9], %s214
        %s216 = sand.u32 %s106, 1
        %s217 = smul.addr %s216, 16
        %s218 = scalar_lea.vmem [#allocation8], %s217
        %v219 = vld [vmem:[%s190] sm:$0xff]
        %v220 = vld [vmem:[%s190 + $0x8] sm:$0xff]
        %v221 = vld [vmem:[#allocation2] sm:$0xff]
        %v222 = vld [vmem:[#allocation2 + $0x8] sm:$0xff]
        %vm223 = vcmask 130048
        %v225 = vsel %vm223, %v221, 0
        %v228 = vsel %vm223, %v222, 0
        %230 = vmatpush.msra.mxu0 0.0
        %231 = vmatpush.msra.mxu0 0.0
        %232 = vmatpush.msra.mxu0 0.0
        %233 = vmatpush.msra.mxu0 0.0
        %234 = vmatpush.msra.mxu0 0.0
        %235 = vmatpush.msra.mxu0 0.0
        %236 = vmatpush.msra.mxu0 0.0
        %237 = vmatpush.msra.mxu0 0.0
        %238 = vmatpush.msra.mxu0 0.0
        %239 = vmatpush.msra.mxu0 0.0
        %240 = vmatpush.msra.mxu0 0.0
        %241 = vmatpush.msra.mxu0 0.0
        %242 = vmatpush.msra.mxu0 0.0
        %243 = vmatpush.msra.mxu0 0.0
        %244 = vmatpush.msra.mxu0 %v220
        %245 = vmatpush.msra.mxu0 %v219
        %246 = vmatmul.f32.gmra.mxu0 %v225
        %v247 = vpop.f32.mrf.mxu0
        %v248 = vadd.f32 0.0, %v247
        %249 = vmatmul.f32.gmra.mxu0 %v228
        %v250 = vpop.f32.mrf.mxu0
        %v251 = vadd.f32 0.0, %v250
        %252 = vdwg.mxu0
        %vm253 = vcmask 261120
        %254 = vst.msk [vmem:[%s218] sm:$0xff] %vm253, %v248
        %255 = vst.msk [vmem:[%s218 + $0x8] sm:$0xff] %vm253, %v251
        %v256 = vsub.f32 %v219, %v248
        %v257 = vsub.f32 %v220, %v251
        %258 = vst.msk [vmem:[%s211] sm:$0xff] %vm253, %v256
        %259 = vst.msk [vmem:[%s211 + $0x8] sm:$0xff] %vm253, %v257
        %s260 = sand.u32 %s80, 1
        %s261 = scalar_lea.sflag [#allocation4], %s260
        %s262 = sand.u32 %s80, 1
        %s263 = smul.addr %s262, 16
        %s264 = scalar_lea.vmem [#allocation7], %s263
        %s265 = sand.u32 %s106, 1
        %s266 = scalar_lea.sflag [#allocation9], %s265
        %s267 = sand.u32 %s106, 1
        %s268 = smul.addr %s267, 16
        %s269 = scalar_lea.vmem [#allocation8], %s268
        // Predicated region
        $region37: #{series_decomp.1} parent=27 // pred_check
          %p270 = pneg %p90
        $region38: #{series_decomp.1} parent=27 // pred_check_branch
          %272 = sbr.rel (%p270) target = $region40
        $region39: #{series_decomp.1} parent=27 // pred_region
          %274 = vsyncadd %s261, 0
          %s275 = smul.addr %s25, 2
          %s276 = smul.addr %s275, 8
          %s277 = scalar_lea.hbm %s2, %s276
          %s278 = sshll.u32 %s264, 4
          %s279 = int_to_ptr.vmem [resolvable:$true] %s278
          %s280 = sshll.u32 %s277, 4
          %s281 = int_to_ptr.hbm [resolvable:$true] %s280
          %286 = dma.vmem_to_hbm [thread:$0]  %s279, 256, %s281, %s261, 128, 128, 8
        $region40: #{series_decomp.1} parent=27 // pred_fallthru
          _
        // Predicated region
        $region41: #{series_decomp.1} parent=27 // pred_check
          %p287 = pneg %p116
        $region42: #{series_decomp.1} parent=27 // pred_check_branch
          %289 = sbr.rel (%p287) target = $region44
        $region43: #{series_decomp.1} parent=27 // pred_region
          %291 = vsyncadd %s266, 0
          %s292 = smul.addr %s25, 2
          %s293 = smul.addr %s292, 8
          %s294 = scalar_lea.hbm %s3, %s293
          %s295 = sshll.u32 %s269, 4
          %s296 = int_to_ptr.vmem [resolvable:$true] %s295
          %s297 = sshll.u32 %s294, 4
          %s298 = int_to_ptr.hbm [resolvable:$true] %s297
          %303 = dma.vmem_to_hbm [thread:$0]  %s296, 256, %s298, %s266, 128, 128, 8
        $region44: #{series_decomp.1} parent=27 // pred_fallthru
          _
      $region28: #{series_decomp.1} parent=5 // pred_fallthru
        _
      %p304 = scmp.le.s32.totalorder 2, %s20
      // Predicated region
      $region45: #{series_decomp.1} parent=5 // pred_check
        %p305 = pneg %p304
      $region46: #{series_decomp.1} parent=5 // pred_check_branch
        %307 = sbr.rel (%p305) target = $region48
      $region47: #{series_decomp.1} parent=5 // pred_region
        %s308 = ssub.s32 %s20, 2
        // Predicated region
        $region49: #{series_decomp.1} parent=47 // pred_check
          %p309 = pneg %p96
        $region50: #{series_decomp.1} parent=47 // pred_check_branch
          %311 = sbr.rel (%p309) target = $region52
        $region51: #{series_decomp.1} parent=47 // pred_region
          %s312 = sand.u32 %s81, 1
          %s313 = scalar_lea.sflag [#allocation4], %s312
          %s314 = sand.u32 %s81, 1
          %s315 = smul.addr %s314, 16
          %s316 = scalar_lea.vmem [#allocation7], %s315
          %318 = dma.done %s313, 256
        $region52: #{series_decomp.1} parent=47 // pred_fallthru
          _
        // Predicated region
        $region53: #{series_decomp.1} parent=47 // pred_check
          %p319 = pneg %p122
        $region54: #{series_decomp.1} parent=47 // pred_check_branch
          %321 = sbr.rel (%p319) target = $region56
        $region55: #{series_decomp.1} parent=47 // pred_region
          %s322 = sand.u32 %s107, 1
          %s323 = scalar_lea.sflag [#allocation9], %s322
          %s324 = sand.u32 %s107, 1
          %s325 = smul.addr %s324, 16
          %s326 = scalar_lea.vmem [#allocation8], %s325
          %328 = dma.done %s323, 256
        $region56: #{series_decomp.1} parent=47 // pred_fallthru
          _
      $region48: #{series_decomp.1} parent=5 // pred_fallthru
        _
    $region6: #{series_decomp.1} parent=1 // loop_footer
      %s24 = sadd.s32 1, %s20
    $region7: #{series_decomp.1} parent=1 // loop_footer_branch
      %19 = sbr.rel target = $region3
    $region8: #{series_decomp.1} parent=1 // loop_exit
      _
    %329 = vsyncpa [#allocation3], 1
    %s330 = scalar_lea.sflag [#allocation3], 1
    %331 = vsyncpa %s330, 1
    %332 = vsyncpa [#allocation6], 1
    %s333 = scalar_lea.sflag [#allocation6], 1
    %334 = vsyncpa %s333, 1
    %335 = vsyncpa [#allocation4], 1
    %s336 = scalar_lea.sflag [#allocation4], 1
    %337 = vsyncpa %s336, 1
    %338 = vsyncpa [#allocation9], 1
    %s339 = scalar_lea.sflag [#allocation9], 1
    %340 = vsyncpa %s339, 1

</llo_original>
